<compile_context>
chip_gen: v5e
topology: v5e:2x2
jax: 0.10.0
libtpu: 0.0.40
codegen_flags: <defaults>
</compile_context>

<pallas_src>
import functools

import numpy as np
import jax
import jax.numpy as jnp
from jax.experimental import pallas as pl
from jax.experimental.pallas import tpu as pltpu


def _focal_loss_kernel(logits_ref, targets_ref, alpha_ref, out_ref, acc_ref,
                       *, gamma, inv_n):
    i = pl.program_id(0)

    @pl.when(i == 0)
    def _init():
        acc_ref[0] = jnp.float32(0.0)

    logits = logits_ref[...].astype(jnp.float32)    # (C, TILE_N)
    targets = targets_ref[...]                      # (1, TILE_N) int32
    alpha = alpha_ref[...]                          # (C, 1) float32
    c, tn = logits.shape

    # one_hot via iota-compare over the sublane (class) axis; padded lanes use
    # target = -1 and therefore get an all-zero column.
    class_ids = jax.lax.broadcasted_iota(jnp.int32, (c, tn), 0)
    one_hot = (class_ids == targets).astype(jnp.float32)       # (C, TILE_N)

    # Fused, numerically-stable softmax gather: no full (C, TILE_N) divide.
    m = jnp.max(logits, axis=0, keepdims=True)                  # (1, TILE_N)
    e = jnp.exp(logits - m)                                     # (C, TILE_N)
    denom = jnp.sum(e, axis=0, keepdims=True)                   # (1, TILE_N)
    numer = jnp.sum(e * one_hot, axis=0, keepdims=True)         # (1, TILE_N)
    pt = numer / denom                                          # (1, TILE_N)

    # alpha[targets] without a gather.
    alpha_t = jnp.sum(one_hot * alpha, axis=0, keepdims=True)   # (1, TILE_N)

    # focal weight: integer gamma -> repeated multiply; pow only as fallback.
    one_minus_pt = 1.0 - pt
    g = float(gamma)
    if g == float(int(g)) and int(g) >= 0:
        if int(g) == 0:
            focal_weight = jnp.ones_like(one_minus_pt)
        else:
            focal_weight = one_minus_pt
            for _ in range(int(g) - 1):
                focal_weight = focal_weight * one_minus_pt
    else:
        focal_weight = jnp.power(one_minus_pt, g)

    # Padded lanes have alpha_t == 0 and pt == 0 -> contribute exactly 0.
    loss = -alpha_t * focal_weight * jnp.log(pt + 1e-8)         # (1, TILE_N)

    acc_ref[0] += jnp.sum(loss)

    @pl.when(i == pl.num_programs(0) - 1)
    def _finalize():
        # reduction='mean'; 1/N baked in as a compile-time constant.
        out_ref[0, 0] = acc_ref[0] * jnp.float32(inv_n)


def class_balanced_alpha(samples_per_class, beta, num_classes):
    """Class-balanced weights exactly as in the PyTorch module __init__."""
    samples = np.asarray(samples_per_class, dtype=np.float64)
    effective_num = 1.0 - np.power(beta, samples)
    w = (1.0 - beta) / effective_num
    w = w / np.sum(w) * num_classes
    return jnp.asarray(w, dtype=jnp.float32)


def class_balanced_focal_loss(logits, targets, alpha, gamma=2.0, tile_n=None):
    """logits: (N, C), targets: (N,) int, alpha: (C,) f32 -> scalar mean loss."""
    n, c = logits.shape

    # Lane-dense layout: (C, N), class axis on sublanes, batch on lanes.
    logits_t = jnp.transpose(logits)                        # (C, N), native dtype
    targets_row = targets.astype(jnp.int32).reshape(1, n)   # (1, N)
    alpha_col = jnp.asarray(alpha, jnp.float32).reshape(c, 1)

    if tile_n is None:
        # Budget derived for v7x (64 MiB VMEM) first; with C=8, f32, two
        # pipeline buffers this is still only ~0.5 MiB for logits.
        tile_n = 8192 if n >= 8192 else ((n + 127) // 128) * 128
    n_pad = pl.cdiv(n, tile_n) * tile_n
    if n_pad != n:
        logits_t = jnp.pad(logits_t, ((0, 0), (0, n_pad - n)))
        # target = -1 on padded lanes -> zero one_hot -> zero loss contribution.
        targets_row = jnp.pad(targets_row, ((0, 0), (0, n_pad - n)),
                              constant_values=-1)

    grid = (n_pad // tile_n,)

    out = pl.pallas_call(
        functools.partial(_focal_loss_kernel, gamma=gamma, inv_n=1.0 / float(n)),
        out_shape=jax.ShapeDtypeStruct((1, 1), jnp.float32),
        grid_spec=pltpu.PrefetchScalarGridSpec(
            num_scalar_prefetch=0,
            grid=grid,
            in_specs=[
                pl.BlockSpec((c, tile_n), lambda i: (0, i)),    # logits (C, N)
                pl.BlockSpec((1, tile_n), lambda i: (0, i)),    # targets (1, N)
                pl.BlockSpec((c, 1), lambda i: (0, 0)),         # alpha (C, 1)
            ],
            out_specs=pl.BlockSpec(memory_space=pltpu.MemorySpace.SMEM),
            scratch_shapes=[pltpu.SMEM((1,), jnp.float32)],
        ),
        compiler_params=pltpu.CompilerParams(
            # Single grid axis is the running-sum reduction -> "arbitrary".
            # TODO(synk): v7x 2-TC variant with per-core partial sums.
            dimension_semantics=("arbitrary",)),
    )(logits_t, targets_row, alpha_col)
    return out[0, 0]


def class_balanced_focal_loss_ref(logits, targets, alpha, gamma=2.0):
    """Pure-JAX reference mirroring the PyTorch forward (reduction='mean')."""
    one_hot = jax.nn.one_hot(targets, logits.shape[1], dtype=jnp.float32)
    probs = jax.nn.softmax(logits, axis=1)
    pt = jnp.sum(probs * one_hot, axis=1)
    focal_weight = jnp.power(1.0 - pt, gamma)
    loss = -alpha[targets] * focal_weight * jnp.log(pt + 1e-8)
    return jnp.mean(loss)


if __name__ == "__main__":
    num_classes = 8
    batch = 16
    beta = 0.999
    gamma = 2.0
    samples_per_class = [500, 120, 75, 310, 42, 990, 13, 260]

    # alpha=None in the module -> class-balanced weights from samples_per_class.
    alpha = class_balanced_alpha(samples_per_class, beta, num_classes)

    key = jax.random.PRNGKey(0)
    k_logits, k_targets = jax.random.split(key)
    logits = jax.random.normal(k_logits, (batch, num_classes), dtype=jnp.float32)
    targets = jax.random.randint(k_targets, (batch,), 0, num_classes,
                                 dtype=jnp.int32)

    out = class_balanced_focal_loss(logits, targets, alpha, gamma=gamma)
    out = jax.block_until_ready(out)

    ref = class_balanced_focal_loss_ref(logits, targets, alpha, gamma=gamma)
    assert jnp.allclose(out, ref, rtol=1e-4, atol=1e-5), (out, ref)

    print("KERNEL_OK")
</pallas_src>

<mosaic_0001>
module attributes {stable_mosaic.version = 11 : i64} {
  func.func @_focal_loss_kernel(%arg0: i32, %arg1: memref<8x128xf32, #tpu.memory_space<vmem>>, %arg2: memref<1x128xi32, #tpu.memory_space<vmem>>, %arg3: memref<8x1xf32, #tpu.memory_space<vmem>>, %arg4: memref<1x1xf32, #tpu.memory_space<smem>>, %arg5: memref<1xf32, #tpu.memory_space<smem>>) attributes {dimension_semantics = [#tpu.dimension_semantics<arbitrary>], iteration_bounds = array<i64: 1>, scalar_prefetch = 0 : i64, scratch_operands = 1 : i64, tpu.core_type = #tpu.core_type<tc>, window_params = [{transform_indices = @transform_0, window_bounds = array<i64: 8, 128>}, {transform_indices = @transform_1, window_bounds = array<i64: 1, 128>}, {pipeline_mode = #tpu.pipeline_mode<synchronous>, transform_indices = @transform_2, window_bounds = array<i64: 8, 1>}, {transform_indices = @transform_3, window_bounds = array<i64: 1, 1>}]} {
    %c0_i32 = arith.constant 0 : i32
    %0 = arith.cmpi eq, %arg0, %c0_i32 : i32
    %1 = arith.extui %0 : i1 to i32
    %c0_i32_0 = arith.constant 0 : i32
    %2 = arith.cmpi ne, %1, %c0_i32_0 : i32
    scf.if %2 {
      %cst_17 = arith.constant 0.000000e+00 : f32
      %c0_18 = arith.constant 0 : index
      %46 = memref.load %arg5[%c0_18] : memref<1xf32, #tpu.memory_space<smem>>
      memref.store %cst_17, %arg5[%c0_18] : memref<1xf32, #tpu.memory_space<smem>>
    } else {
    }
    %c0 = arith.constant 0 : index
    %c0_1 = arith.constant 0 : index
    %3 = vector.load %arg1[%c0, %c0_1] : memref<8x128xf32, #tpu.memory_space<vmem>>, vector<8x128xf32>
    %c0_2 = arith.constant 0 : index
    %c0_3 = arith.constant 0 : index
    %4 = vector.load %arg2[%c0_2, %c0_3] : memref<1x128xi32, #tpu.memory_space<vmem>>, vector<1x128xi32>
    %c0_4 = arith.constant 0 : index
    %c0_5 = arith.constant 0 : index
    %5 = vector.load %arg3[%c0_4, %c0_5] : memref<8x1xf32, #tpu.memory_space<vmem>>, vector<8x1xf32>
    %6 = tpu.iota {dimensions = array<i32: 0>} : vector<8x128xi32>
    %7 = vector.broadcast %4 : vector<1x128xi32> to vector<8x128xi32>
    %8 = arith.cmpi eq, %6, %7 : vector<8x128xi32>
    %9 = arith.extui %8 : vector<8x128xi1> to vector<8x128xi32>
    %10 = arith.sitofp %9 : vector<8x128xi32> to vector<8x128xf32>
    %cst = arith.constant dense<0xFF800000> : vector<128xf32>
    %11 = vector.multi_reduction <maximumf>, %3, %cst [0] : vector<8x128xf32> to vector<128xf32>
    %12 = vector.shape_cast %11 : vector<128xf32> to vector<1x128xf32>
    %13 = vector.broadcast %12 : vector<1x128xf32> to vector<8x128xf32>
    %14 = arith.subf %3, %13 : vector<8x128xf32>
    %15 = math.exp %14 : vector<8x128xf32>
    %cst_6 = arith.constant dense<0.000000e+00> : vector<128xf32>
    %16 = vector.multi_reduction <add>, %15, %cst_6 [0] : vector<8x128xf32> to vector<128xf32>
    %17 = vector.shape_cast %16 : vector<128xf32> to vector<1x128xf32>
    %18 = arith.mulf %15, %10 : vector<8x128xf32>
    %cst_7 = arith.constant dense<0.000000e+00> : vector<128xf32>
    %19 = vector.multi_reduction <add>, %18, %cst_7 [0] : vector<8x128xf32> to vector<128xf32>
    %20 = vector.shape_cast %19 : vector<128xf32> to vector<1x128xf32>
    %21 = arith.divf %20, %17 : vector<1x128xf32>
    %22 = vector.broadcast %5 : vector<8x1xf32> to vector<8x128xf32>
    %23 = arith.mulf %10, %22 : vector<8x128xf32>
    %cst_8 = arith.constant dense<0.000000e+00> : vector<128xf32>
    %24 = vector.multi_reduction <add>, %23, %cst_8 [0] : vector<8x128xf32> to vector<128xf32>
    %25 = vector.shape_cast %24 : vector<128xf32> to vector<1x128xf32>
    %cst_9 = arith.constant 1.000000e+00 : f32
    %26 = vector.broadcast %cst_9 : f32 to vector<1x128xf32>
    %27 = arith.subf %26, %21 : vector<1x128xf32>
    %28 = arith.mulf %27, %27 : vector<1x128xf32>
    %cst_10 = arith.constant 0.000000e+00 : f32
    %29 = vector.broadcast %cst_10 : f32 to vector<1x128xf32>
    %30 = arith.subf %29, %25 : vector<1x128xf32>
    %31 = arith.mulf %30, %28 : vector<1x128xf32>
    %cst_11 = arith.constant 9.99999993E-9 : f32
    %32 = vector.broadcast %cst_11 : f32 to vector<1x128xf32>
    %33 = arith.addf %21, %32 : vector<1x128xf32>
    %34 = math.log %33 : vector<1x128xf32>
    %35 = arith.mulf %31, %34 : vector<1x128xf32>
    %c0_12 = arith.constant 0 : index
    %36 = memref.load %arg5[%c0_12] : memref<1xf32, #tpu.memory_space<smem>>
    %37 = vector.shape_cast %35 : vector<1x128xf32> to vector<1x1x128xf32>
    %cst_13 = arith.constant dense<0.000000e+00> : vector<1xf32>
    %38 = vector.multi_reduction <add>, %37, %cst_13 [1, 2] : vector<1x1x128xf32> to vector<1xf32>
    %39 = vector.shape_cast %38 : vector<1xf32> to vector<1x1x1xf32>
    %40 = vector.extract %39[0, 0, 0] : f32 from vector<1x1x1xf32>
    %41 = arith.addf %36, %40 : f32
    %c0_14 = arith.constant 0 : index
    %42 = memref.load %arg5[%c0_14] : memref<1xf32, #tpu.memory_space<smem>>
    memref.store %41, %arg5[%c0_14] : memref<1xf32, #tpu.memory_space<smem>>
    %c0_i32_15 = arith.constant 0 : i32
    %43 = arith.cmpi eq, %arg0, %c0_i32_15 : i32
    %44 = arith.extui %43 : i1 to i32
    %c0_i32_16 = arith.constant 0 : i32
    %45 = arith.cmpi ne, %44, %c0_i32_16 : i32
    scf.if %45 {
      %c0_17 = arith.constant 0 : index
      %46 = memref.load %arg5[%c0_17] : memref<1xf32, #tpu.memory_space<smem>>
      %cst_18 = arith.constant 6.250000e-02 : f32
      %47 = arith.mulf %46, %cst_18 : f32
      %c0_19 = arith.constant 0 : index
      %c0_20 = arith.constant 0 : index
      %48 = memref.load %arg4[%c0_19, %c0_20] : memref<1x1xf32, #tpu.memory_space<smem>>
      memref.store %47, %arg4[%c0_19, %c0_20] : memref<1x1xf32, #tpu.memory_space<smem>>
    } else {
    }
    return
  }
  func.func @transform_0(%arg0: i32) -> (i32, i32) {
    %c0_i32 = arith.constant 0 : i32
    %c0_i32_0 = arith.constant 0 : i32
    return %c0_i32, %arg0 : i32, i32
  }
  func.func @transform_1(%arg0: i32) -> (i32, i32) {
    %c0_i32 = arith.constant 0 : i32
    %c0_i32_0 = arith.constant 0 : i32
    return %c0_i32, %arg0 : i32, i32
  }
  func.func @transform_2(%arg0: i32) -> (i32, i32) {
    %c0_i32 = arith.constant 0 : i32
    %c0_i32_0 = arith.constant 0 : i32
    %c0_i32_1 = arith.constant 0 : i32
    return %c0_i32, %c0_i32_0 : i32, i32
  }
  func.func @transform_3(%arg0: i32) -> (i32, i32) {
    %c0_i32 = arith.constant 0 : i32
    %c0_i32_0 = arith.constant 0 : i32
    %c0_i32_1 = arith.constant 0 : i32
    return %c0_i32, %c0_i32_0 : i32, i32
  }
}

</mosaic_0001>

<llo_original>
// kernel: tpu_custom_call.1
$region0: #{tpu_custom_call.1}
  #allocation0 [shape = 'u32[]', space=smem, size = 0x4, offset = 0x4, fixed_abs, tag = 'smem constant byte address 0x4 - core index']
  #allocation1 [shape = 'u32[72,128]{1,0:T(1,128)}', space=vmem, size = 0x9000, scoped, tag = 'internal scratch']
  #allocation2 [shape = 'f32[1]{0:T(128)}', space=smem, size = 0x200, scoped, tag = 'scratch operand']
  %s0 = inlined_call_operand.vmem [shape: f32[8,128], index: 0, kind: input, shape index: {}]
  %s1 = inlined_call_operand.vmem [shape: s32[1,128], index: 1, kind: input, shape index: {}]
  %s2 = inlined_call_operand.vmem [shape: f32[8,1], index: 2, kind: input, shape index: {}]
  %s3 = inlined_call_operand.hbm [shape: f32[1,1], index: 3, kind: output, shape index: {}]
  %s4 = sld [smem:[#allocation0]]
  $region30: #{tpu_custom_call.1} parent=0
    _
  %s6 = ssub.s32 1, %s4
  %s7 = scalar_select 0, %s6, %s4
  $region1: #{tpu_custom_call.1} parent=0
    #allocation3 [shape = 'u8[512]{0}', space=smem, size = 0x200, scoped, tag = 'output window, operand 0, single buffered']
    #allocation4 [shape = 's32[1]{0}', space=sflag, size = 0x4, scoped, tag = 'scoped memory for tpu_custom_call.1']
    %8 = vsyncpa [#allocation4], 0
    // Predicated region
    $region2: #{tpu_custom_call.1} parent=1 // pred_check
      _
    $region3: #{tpu_custom_call.1} parent=1 // pred_check_branch
      %10 = sbr.rel (0) target = $region5
    $region4: #{tpu_custom_call.1} parent=1 // pred_region
      _
    $region5: #{tpu_custom_call.1} parent=1 // pred_fallthru
      _
    // Predicated region
    $region6: #{tpu_custom_call.1} parent=1 // pred_check
      _
    $region7: #{tpu_custom_call.1} parent=1 // pred_check_branch
      %12 = sbr.rel (0) target = $region9
    $region8: #{tpu_custom_call.1} parent=1 // pred_region
      _
    $region9: #{tpu_custom_call.1} parent=1 // pred_fallthru
      _
    // Predicated region
    $region10: #{tpu_custom_call.1} parent=1 // pred_check
      _
    $region11: #{tpu_custom_call.1} parent=1 // pred_check_branch
      %14 = sbr.rel (0) target = $region13
    $region12: #{tpu_custom_call.1} parent=1 // pred_region
      _
    $region13: #{tpu_custom_call.1} parent=1 // pred_fallthru
      _
    %p15 = scmp.eq.s32.totalorder 0, 0
    // Predicated region
    $region14: #{tpu_custom_call.1} parent=1 // pred_check
      %p16 = pneg %p15
    $region15: #{tpu_custom_call.1} parent=1 // pred_check_branch
      %18 = sbr.rel (%p16) target = $region17
    $region16: #{tpu_custom_call.1} parent=1 // pred_region
      %s19 = scalar_lea.smem [#allocation2], 0
      %20 = sst [smem:[%s19]] 0.0
    $region17: #{tpu_custom_call.1} parent=1 // pred_fallthru
      _
    %v21 = vld [vmem:[%s0] sm:$0xff]
    %v22 = vld [vmem:[%s1] sm:$0x1]
    %v23 = vld [vmem:[%s2] sm:$0xff]
    %v24 = vlaneseq
    %v25 = vshrl.u32 %v24, 7
    %v26 = vperm.slane %v22, 0
    %vm27 = vcmp.eq.s32.totalorder %v25, %v26
    %v28 = vsel %vm27, 1, 0
    %v29 = vcvt.s32.f32 %v28
    %v30 = vrot.slane %v21, 4
    %v31 = vmax.f32 %v21, %v30
    %v32 = vrot.slane %v31, 2
    %v33 = vmax.f32 %v31, %v32
    %v34 = vrot.slane %v33, 1
    %v35 = vmax.f32 %v33, %v34
    %v36 = vsub.f32 %v21, %v35
    %v37 = vmul.f32 %v36, 1.442695
    %v38 = vpow.pop %v37
    %v39 = vrot.slane %v38, 4
    %v40 = vadd.f32 %v38, %v39
    %v41 = vrot.slane %v40, 2
    %v42 = vadd.f32 %v40, %v41
    %v43 = vrot.slane %v42, 1
    %v44 = vadd.f32 %v42, %v43
    %v45 = vmul.f32 %v38, %v29
    %v46 = vrot.slane %v45, 4
    %v47 = vadd.f32 %v45, %v46
    %v48 = vrot.slane %v47, 2
    %v49 = vadd.f32 %v47, %v48
    %v50 = vrot.slane %v49, 1
    %v51 = vadd.f32 %v49, %v50
    %v52 = vrcp.pop %v44
    %v53 = vmul.f32 %v44, %v52
    %v54 = vsub.f32 1.0, %v53
    %v55 = vmul.f32 %v52, %v54
    %v56 = vadd.f32 %v52, %v55
    %vm57 = vweird.f32 %v44
    %vm58 = vweird.f32 %v52
    %vm59 = vmor %vm57, %vm58
    %v60 = vsel %vm59, %v52, %v56
    %v61 = vand.u32 2147483647, %v44
    %vm62 = vcmp.eq.f32.partialorder %v61, 8.507059e+37
    %v63 = vand.u32 %v44, 2147483648
    %v64 = vor.u32 1.1754944e-38, %v63
    %v65 = vsel %vm62, %v64, %v60
    %v66 = vmul.f32 %v51, %v65
    %68 = vset.pattern.permute.xlu0 0
    %69 = vperm.xlu0 %68, %v23
    %v70 = vpop.permute.xlu0 %69
    %v72 = vmul.f32 %v29, %v70
    %v73 = vrot.slane %v72, 4
    %v74 = vadd.f32 %v72, %v73
    %v75 = vrot.slane %v74, 2
    %v76 = vadd.f32 %v74, %v75
    %v77 = vrot.slane %v76, 1
    %v78 = vadd.f32 %v76, %v77
    %v79 = vsub.f32 1.0, %v66
    %v80 = vmul.f32 %v79, %v79
    %v81 = vsub.f32 0.0, %v78
    %v82 = vmul.f32 %v81, %v80
    %v83 = vadd.f32 %v66, 1e-08
    %v84 = vlog2.pop %v83
    %v85 = vmul.f32 %v84, 0.6931472
    %v86 = vmul.f32 %v82, %v85
    %s87 = sld [smem:[#allocation2]]
    %vm88 = vcmask 1040384
    %v89 = vsel %vm88, %v86, 0.0
    %90 = vadd.xlane.f32.xlu0 %v89
    %v91 = vpop.xlane.xlu0 %90
    %v92 = vrot.slane %v91, 4
    %v93 = vadd.f32 %v91, %v92
    %v94 = vrot.slane %v93, 2
    %v95 = vadd.f32 %v93, %v94
    %v96 = vrot.slane %v95, 1
    %v97 = vadd.f32 %v95, %v96
    %s98 = vtos %v97
    %s99 = sadd.f32 %s87, %s98
    %s100 = scalar_lea.smem [#allocation2], 0
    %101 = sst [smem:[%s100]] %s99
    // Predicated region
    $region18: #{tpu_custom_call.1} parent=1 // pred_check
      %p102 = pneg %p15
    $region19: #{tpu_custom_call.1} parent=1 // pred_check_branch
      %104 = sbr.rel (%p102) target = $region21
    $region20: #{tpu_custom_call.1} parent=1 // pred_region
      %s105 = sld [smem:[#allocation2]]
      %s106 = smul.f32 %s105, 0.0625
      %s107 = scalar_lea.smem [#allocation3], 0
      %108 = sst [smem:[%s107]] %s106
    $region21: #{tpu_custom_call.1} parent=1 // pred_fallthru
      _
    // Predicated region
    $region22: #{tpu_custom_call.1} parent=1 // pred_check
      _
    $region23: #{tpu_custom_call.1} parent=1 // pred_check_branch
      %110 = sbr.rel (0) target = $region25
    $region24: #{tpu_custom_call.1} parent=1 // pred_region
      %112 = vsyncadd [#allocation4], 0
      %s114 = sshll.u32 %s3, 4
      %s115 = int_to_ptr.hbm [resolvable:$true] %s114
      %117 = dma.smem_to_hbm [#allocation3], 16, %s115, [#allocation4]
    $region25: #{tpu_custom_call.1} parent=1 // pred_fallthru
      _
    // Predicated region
    $region26: #{tpu_custom_call.1} parent=1 // pred_check
      _
    $region27: #{tpu_custom_call.1} parent=1 // pred_check_branch
      %119 = sbr.rel (0) target = $region29
    $region28: #{tpu_custom_call.1} parent=1 // pred_region
      %121 = dma.done [#allocation4], 16
    $region29: #{tpu_custom_call.1} parent=1 // pred_fallthru
      _
    %122 = sfence
    %123 = vsyncpa [#allocation4], 1

</llo_original>
